<compile_context>
chip_gen: v7x
topology: tpu7x:2x2x1
jax: 0.10.0
libtpu: 0.0.40
codegen_flags: <defaults>
</compile_context>

<pallas_src>
import jax
import jax.numpy as jnp
from jax import lax
from jax.experimental import pallas as pl
from jax.experimental.pallas import tpu as pltpu

K = 3  # kernel_size
S = 2  # stride


def _maxpool3x3s2_kernel(ee_ref, eo_ref, oe_ref, oo_ref, o_ref):
    # Quadrant refs hold the parity-split input:
    #   ee[i, j] = x[2i,   2j]     eo[i, j] = x[2i,   2j+1]
    #   oe[i, j] = x[2i+1, 2j]     oo[i, j] = x[2i+1, 2j+1]
    # so every element of the 3x3 / stride-2 window is a unit-stride slice.
    _, _, oh, ow = o_ref.shape

    ee = ee_ref[...][0]          # (CB, OH+1, OW+1)   (input dtype, no upcast)
    eo = eo_ref[...][0]          # (CB, OH+1, >=OW)
    oe = oe_ref[...][0]          # (CB, >=OH, OW+1)
    oo = oo_ref[...][0]          # (CB, >=OH, >=OW)

    # ---- W direction: 3-tap max (cols 2j, 2j+1, 2j+2), per row parity ----
    ce = jnp.maximum(jnp.maximum(ee[:, :, 0:ow], eo[:, :, 0:ow]),
                     ee[:, :, 1:ow + 1])                    # even rows
    co = jnp.maximum(jnp.maximum(oe[:, :, 0:ow], oo[:, :, 0:ow]),
                     oe[:, :, 1:ow + 1])                    # odd rows

    # ---- H direction: 3-tap max (rows 2i, 2i+1, 2i+2) ----
    out = jnp.maximum(jnp.maximum(ce[:, 0:oh, :], co[:, 0:oh, :]),
                      ce[:, 1:oh + 1, :])                   # (CB, OH, OW)

    o_ref[...] = out[None].astype(o_ref.dtype)


def _pick_channel_block(n, c, h, w, itemsize, target_steps=8, max_bytes=4 << 20):
    """Largest divisor of c that still yields >= target_steps grid steps
    (so DMAs pipeline, and both v7x TensorCores get several steps) while
    keeping the per-step input block comfortably inside scoped VMEM."""
    best = 1
    for cb in range(1, c + 1):
        if c % cb:
            continue
        quad_bytes = cb * (h + 1) * (w + 2) * itemsize   # 4 quadrants combined
        if quad_bytes > max_bytes:
            break
        if n * (c // cb) >= target_steps:
            best = cb
    return best


@jax.jit
def maxpool2d_nchw(x):
    """MaxPool2d(kernel_size=3, stride=2, padding=0, ceil_mode=False), NCHW."""
    n, c, h, w = x.shape
    oh = (h - K) // S + 1        # floor == ceil_mode=False
    ow = (w - K) // S + 1
    cb = _pick_channel_block(n, c, h, w, jnp.dtype(x.dtype).itemsize)

    # Parity split (one cheap XLA pass over the input).  Inside the kernel this
    # turns the stride-2 window into nine unit-stride shifted maxima.
    x_ee = x[:, :, 0::2, 0::2]   # (n, c, ceil(h/2),  ceil(w/2))
    x_eo = x[:, :, 0::2, 1::2]   # (n, c, ceil(h/2),  floor(w/2))
    x_oe = x[:, :, 1::2, 0::2]   # (n, c, floor(h/2), ceil(w/2))
    x_oo = x[:, :, 1::2, 1::2]   # (n, c, floor(h/2), floor(w/2))

    he, we = x_ee.shape[2], x_ee.shape[3]
    ho, wo = x_oo.shape[2], x_oo.shape[3]

    idx = lambda i, j: (i, j, 0, 0)
    return pl.pallas_call(
        _maxpool3x3s2_kernel,
        out_shape=jax.ShapeDtypeStruct((n, c, oh, ow), x.dtype),
        grid_spec=pltpu.PrefetchScalarGridSpec(
            num_scalar_prefetch=0,
            grid=(n, c // cb),
            in_specs=[pl.BlockSpec((1, cb, he, we), idx),
                      pl.BlockSpec((1, cb, he, wo), idx),
                      pl.BlockSpec((1, cb, ho, we), idx),
                      pl.BlockSpec((1, cb, ho, wo), idx)],
            out_specs=pl.BlockSpec((1, cb, oh, ow), idx),
        ),
        compiler_params=pltpu.CompilerParams(
            dimension_semantics=("parallel", "parallel"),
        ),
    )(x_ee, x_eo, x_oe, x_oo)


if __name__ == "__main__":
    # Small shapes consistent with the module's NCHW input (orig: 1x64x109x109);
    # H odd / W even exercises both parity paths.
    N, C, H, W = 2, 8, 17, 16
    key = jax.random.PRNGKey(0)
    x = jax.random.normal(key, (N, C, H, W), dtype=jnp.float32)

    y = jax.block_until_ready(maxpool2d_nchw(x))

    # Reference (plain XLA) with identical semantics.
    ref = lax.reduce_window(x, -jnp.inf, lax.max, (1, 1, K, K), (1, 1, S, S), "VALID")
    assert y.shape == ref.shape == (N, C, (H - K) // S + 1, (W - K) // S + 1)
    assert jnp.allclose(y, ref, atol=0.0, rtol=0.0)

    print("KERNEL_OK")
</pallas_src>

<mosaic_0001>
module attributes {stable_mosaic.version = 11 : i64} {
  func.func @_maxpool3x3s2_kernel(%arg0: i32, %arg1: i32, %arg2: memref<1x2x9x8xf32, #tpu.memory_space<vmem>>, %arg3: memref<1x2x9x8xf32, #tpu.memory_space<vmem>>, %arg4: memref<1x2x8x8xf32, #tpu.memory_space<vmem>>, %arg5: memref<1x2x8x8xf32, #tpu.memory_space<vmem>>, %arg6: memref<1x2x8x7xf32, #tpu.memory_space<vmem>>) attributes {dimension_semantics = [#tpu.dimension_semantics<parallel>, #tpu.dimension_semantics<parallel>], iteration_bounds = array<i64: 2, 4>, scalar_prefetch = 0 : i64, scratch_operands = 0 : i64, tpu.core_type = #tpu.core_type<tc>, window_params = [{transform_indices = @transform_0, window_bounds = array<i64: 1, 2, 9, 8>}, {transform_indices = @transform_1, window_bounds = array<i64: 1, 2, 9, 8>}, {transform_indices = @transform_2, window_bounds = array<i64: 1, 2, 8, 8>}, {transform_indices = @transform_3, window_bounds = array<i64: 1, 2, 8, 8>}, {transform_indices = @transform_4, window_bounds = array<i64: 1, 2, 8, 7>}]} {
    %c0 = arith.constant 0 : index
    %c0_0 = arith.constant 0 : index
    %c0_1 = arith.constant 0 : index
    %c0_2 = arith.constant 0 : index
    %0 = vector.load %arg2[%c0, %c0_0, %c0_1, %c0_2] : memref<1x2x9x8xf32, #tpu.memory_space<vmem>>, vector<1x2x9x8xf32>
    %1 = vector.shape_cast %0 : vector<1x2x9x8xf32> to vector<2x9x8xf32>
    %c0_3 = arith.constant 0 : index
    %c0_4 = arith.constant 0 : index
    %c0_5 = arith.constant 0 : index
    %c0_6 = arith.constant 0 : index
    %2 = vector.load %arg3[%c0_3, %c0_4, %c0_5, %c0_6] : memref<1x2x9x8xf32, #tpu.memory_space<vmem>>, vector<1x2x9x8xf32>
    %3 = vector.shape_cast %2 : vector<1x2x9x8xf32> to vector<2x9x8xf32>
    %c0_7 = arith.constant 0 : index
    %c0_8 = arith.constant 0 : index
    %c0_9 = arith.constant 0 : index
    %c0_10 = arith.constant 0 : index
    %4 = vector.load %arg4[%c0_7, %c0_8, %c0_9, %c0_10] : memref<1x2x8x8xf32, #tpu.memory_space<vmem>>, vector<1x2x8x8xf32>
    %5 = vector.shape_cast %4 : vector<1x2x8x8xf32> to vector<2x8x8xf32>
    %c0_11 = arith.constant 0 : index
    %c0_12 = arith.constant 0 : index
    %c0_13 = arith.constant 0 : index
    %c0_14 = arith.constant 0 : index
    %6 = vector.load %arg5[%c0_11, %c0_12, %c0_13, %c0_14] : memref<1x2x8x8xf32, #tpu.memory_space<vmem>>, vector<1x2x8x8xf32>
    %7 = vector.shape_cast %6 : vector<1x2x8x8xf32> to vector<2x8x8xf32>
    %8 = vector.extract_strided_slice %1 {offsets = [0, 0, 0], sizes = [2, 9, 7], strides = [1, 1, 1]} : vector<2x9x8xf32> to vector<2x9x7xf32>
    %9 = vector.extract_strided_slice %3 {offsets = [0, 0, 0], sizes = [2, 9, 7], strides = [1, 1, 1]} : vector<2x9x8xf32> to vector<2x9x7xf32>
    %10 = arith.maximumf %8, %9 : vector<2x9x7xf32>
    %11 = vector.extract_strided_slice %1 {offsets = [0, 0, 1], sizes = [2, 9, 7], strides = [1, 1, 1]} : vector<2x9x8xf32> to vector<2x9x7xf32>
    %12 = arith.maximumf %10, %11 : vector<2x9x7xf32>
    %13 = vector.extract_strided_slice %5 {offsets = [0, 0, 0], sizes = [2, 8, 7], strides = [1, 1, 1]} : vector<2x8x8xf32> to vector<2x8x7xf32>
    %14 = vector.extract_strided_slice %7 {offsets = [0, 0, 0], sizes = [2, 8, 7], strides = [1, 1, 1]} : vector<2x8x8xf32> to vector<2x8x7xf32>
    %15 = arith.maximumf %13, %14 : vector<2x8x7xf32>
    %16 = vector.extract_strided_slice %5 {offsets = [0, 0, 1], sizes = [2, 8, 7], strides = [1, 1, 1]} : vector<2x8x8xf32> to vector<2x8x7xf32>
    %17 = arith.maximumf %15, %16 : vector<2x8x7xf32>
    %18 = vector.extract_strided_slice %12 {offsets = [0, 0, 0], sizes = [2, 8, 7], strides = [1, 1, 1]} : vector<2x9x7xf32> to vector<2x8x7xf32>
    %19 = arith.maximumf %18, %17 : vector<2x8x7xf32>
    %20 = vector.extract_strided_slice %12 {offsets = [0, 1, 0], sizes = [2, 8, 7], strides = [1, 1, 1]} : vector<2x9x7xf32> to vector<2x8x7xf32>
    %21 = arith.maximumf %19, %20 : vector<2x8x7xf32>
    %22 = vector.shape_cast %21 : vector<2x8x7xf32> to vector<1x2x8x7xf32>
    %c0_15 = arith.constant 0 : index
    %c0_16 = arith.constant 0 : index
    %c0_17 = arith.constant 0 : index
    %c0_18 = arith.constant 0 : index
    %23 = vector.load %arg6[%c0_15, %c0_16, %c0_17, %c0_18] : memref<1x2x8x7xf32, #tpu.memory_space<vmem>>, vector<1x2x8x7xf32>
    tpu.vector_store %arg6[%c0_15, %c0_16, %c0_17, %c0_18], %22 {strides = array<i32>} : memref<1x2x8x7xf32, #tpu.memory_space<vmem>>, vector<1x2x8x7xf32>,
    return
  }
  func.func @transform_0(%arg0: i32, %arg1: i32) -> (i32, i32, i32, i32) {
    %c0_i32 = arith.constant 0 : i32
    %c0_i32_0 = arith.constant 0 : i32
    %c0_i32_1 = arith.constant 0 : i32
    return %arg0, %arg1, %c0_i32, %c0_i32_0 : i32, i32, i32, i32
  }
  func.func @transform_1(%arg0: i32, %arg1: i32) -> (i32, i32, i32, i32) {
    %c0_i32 = arith.constant 0 : i32
    %c0_i32_0 = arith.constant 0 : i32
    %c0_i32_1 = arith.constant 0 : i32
    return %arg0, %arg1, %c0_i32, %c0_i32_0 : i32, i32, i32, i32
  }
  func.func @transform_2(%arg0: i32, %arg1: i32) -> (i32, i32, i32, i32) {
    %c0_i32 = arith.constant 0 : i32
    %c0_i32_0 = arith.constant 0 : i32
    %c0_i32_1 = arith.constant 0 : i32
    return %arg0, %arg1, %c0_i32, %c0_i32_0 : i32, i32, i32, i32
  }
  func.func @transform_3(%arg0: i32, %arg1: i32) -> (i32, i32, i32, i32) {
    %c0_i32 = arith.constant 0 : i32
    %c0_i32_0 = arith.constant 0 : i32
    %c0_i32_1 = arith.constant 0 : i32
    return %arg0, %arg1, %c0_i32, %c0_i32_0 : i32, i32, i32, i32
  }
  func.func @transform_4(%arg0: i32, %arg1: i32) -> (i32, i32, i32, i32) {
    %c0_i32 = arith.constant 0 : i32
    %c0_i32_0 = arith.constant 0 : i32
    %c0_i32_1 = arith.constant 0 : i32
    return %arg0, %arg1, %c0_i32, %c0_i32_0 : i32, i32, i32, i32
  }
}

</mosaic_0001>

<llo_original>
// kernel: maxpool2d_nchw.1
$region0: #{maxpool2d_nchw.1}
  #allocation0 [shape = 'u32[]', space=smem, size = 0x4, offset = 0x4, fixed_abs, tag = 'smem constant byte address 0x4 - core index']
  #allocation1 [shape = 'u32[144,128]{1,0:T(1,128)}', space=vmem, size = 0x12000, scoped, tag = 'internal scratch']
  %s0 = inlined_call_operand.vmem [shape: f32[2,8,9,8], index: 0, kind: input, shape index: {}]
  %s1 = inlined_call_operand.vmem [shape: f32[2,8,9,8], index: 1, kind: input, shape index: {}]
  %s2 = inlined_call_operand.vmem [shape: f32[2,8,8,8], index: 2, kind: input, shape index: {}]
  %s3 = inlined_call_operand.vmem [shape: f32[2,8,8,8], index: 3, kind: input, shape index: {}]
  %s4 = inlined_call_operand.vmem [shape: f32[2,8,8,7], index: 4, kind: output, shape index: {}]
  %s5 = sld [smem:[#allocation0]]
  $region49: #{maxpool2d_nchw.1} parent=0
    _
  %s7 = ssub.s32 1, %s5
  %s8 = scalar_select 0, %s7, %s5
  loop: start=0, step=1, limit=10
  $region2: #{maxpool2d_nchw.1} parent=0 // loop_pre_header
    _
  $region3: #{maxpool2d_nchw.1} parent=0 // loop_header
    %s10 = sphi 0, %s14
    %p11 = scmp.ge.s32.totalorder %s10, 10
    %s17 = sphi 0, %s29
    %s18 = sphi 0, %s25
    %s19 = sphi 0, %s17
    %s20 = sphi 0, %s18
    %s21 = sphi 0, %s19
    %s22 = sphi 0, %s20
    %s34 = sphi 0, %s36
    %s37 = sphi 0, %s34
    %s38 = sphi 0, %s37
    %s54 = sphi 0, %s38
    %s62 = sphi 0, %s64
    %s65 = sphi 0, %s62
    %s66 = sphi 0, %s65
    %s82 = sphi 0, %s66
    %s90 = sphi 0, %s92
    %s93 = sphi 0, %s90
    %s94 = sphi 0, %s93
    %s110 = sphi 0, %s94
    %s118 = sphi 0, %s120
    %s121 = sphi 0, %s118
    %s122 = sphi 0, %s121
    %s138 = sphi 0, %s122
    %s146 = sphi 0, %s148
    %s149 = sphi 0, %s146
    %s150 = sphi 0, %s149
    %s166 = sphi 0, %s150
  $region4: #{maxpool2d_nchw.1} parent=0 // loop_header_branch
    %13 = sbr.rel (%p11) target = $region8
  $region5: #{maxpool2d_nchw.1} parent=0 // loop_body
    %s15 = ssub.s32 %s10, 1
    %s16 = ssub.s32 %s10, 2
    %s23 = sadd.s32 1, %s18
    %p24 = scmp.ge.s32.totalorder %s23, 4
    %s25 = scalar_select %p24, 0, %s23
    %s26 = sadd.s32 1, %s17
    %s27 = scalar_select %p24, %s26, %s17
    %p28 = scmp.ge.s32.totalorder %s27, 2
    %s29 = scalar_select %p28, 0, %s27
    %s30 = ssub.s32 %s17, %s29
    %s31 = ssub.s32 %s18, %s25
    %s32 = sor.u32 %s30, %s31
    %p33 = scmp.eq.s32.totalorder %s32, 0
    %s35 = sadd.s32 %s34, 1
    %s36 = scalar_select %p33, %s34, %s35
    %p39 = pneg %p33
    %p40 = scmp.eq.s32.totalorder %s10, 7
    %p41 = por %p39, %p40
    %p42 = scmp.ne.s32.totalorder %s34, %s37
    %p43 = scmp.eq.s32.totalorder %s10, 0
    %p44 = por %p42, %p43
    %p45 = scmp.ne.s32.totalorder %s34, %s37
    %p46 = scmp.eq.s32.totalorder %s15, 7
    %p47 = por %p45, %p46
    %p48 = scmp.ne.s32.totalorder %s37, %s38
    %p49 = scmp.eq.s32.totalorder %s15, 0
    %p50 = por %p48, %p49
    %p51 = scmp.ne.s32.totalorder %s37, %s38
    %p52 = scmp.eq.s32.totalorder %s16, 7
    %p53 = por %p51, %p52
    %p55 = scmp.ne.s32.totalorder %s38, %s54
    %p56 = scmp.eq.s32.totalorder %s16, 0
    %p57 = por %p55, %p56
    %s58 = ssub.s32 %s17, %s29
    %s59 = ssub.s32 %s18, %s25
    %s60 = sor.u32 %s58, %s59
    %p61 = scmp.eq.s32.totalorder %s60, 0
    %s63 = sadd.s32 %s62, 1
    %s64 = scalar_select %p61, %s62, %s63
    %p67 = pneg %p61
    %p68 = scmp.eq.s32.totalorder %s10, 7
    %p69 = por %p67, %p68
    %p70 = scmp.ne.s32.totalorder %s62, %s65
    %p71 = scmp.eq.s32.totalorder %s10, 0
    %p72 = por %p70, %p71
    %p73 = scmp.ne.s32.totalorder %s62, %s65
    %p74 = scmp.eq.s32.totalorder %s15, 7
    %p75 = por %p73, %p74
    %p76 = scmp.ne.s32.totalorder %s65, %s66
    %p77 = scmp.eq.s32.totalorder %s15, 0
    %p78 = por %p76, %p77
    %p79 = scmp.ne.s32.totalorder %s65, %s66
    %p80 = scmp.eq.s32.totalorder %s16, 7
    %p81 = por %p79, %p80
    %p83 = scmp.ne.s32.totalorder %s66, %s82
    %p84 = scmp.eq.s32.totalorder %s16, 0
    %p85 = por %p83, %p84
    %s86 = ssub.s32 %s17, %s29
    %s87 = ssub.s32 %s18, %s25
    %s88 = sor.u32 %s86, %s87
    %p89 = scmp.eq.s32.totalorder %s88, 0
    %s91 = sadd.s32 %s90, 1
    %s92 = scalar_select %p89, %s90, %s91
    %p95 = pneg %p89
    %p96 = scmp.eq.s32.totalorder %s10, 7
    %p97 = por %p95, %p96
    %p98 = scmp.ne.s32.totalorder %s90, %s93
    %p99 = scmp.eq.s32.totalorder %s10, 0
    %p100 = por %p98, %p99
    %p101 = scmp.ne.s32.totalorder %s90, %s93
    %p102 = scmp.eq.s32.totalorder %s15, 7
    %p103 = por %p101, %p102
    %p104 = scmp.ne.s32.totalorder %s93, %s94
    %p105 = scmp.eq.s32.totalorder %s15, 0
    %p106 = por %p104, %p105
    %p107 = scmp.ne.s32.totalorder %s93, %s94
    %p108 = scmp.eq.s32.totalorder %s16, 7
    %p109 = por %p107, %p108
    %p111 = scmp.ne.s32.totalorder %s94, %s110
    %p112 = scmp.eq.s32.totalorder %s16, 0
    %p113 = por %p111, %p112
    %s114 = ssub.s32 %s17, %s29
    %s115 = ssub.s32 %s18, %s25
    %s116 = sor.u32 %s114, %s115
    %p117 = scmp.eq.s32.totalorder %s116, 0
    %s119 = sadd.s32 %s118, 1
    %s120 = scalar_select %p117, %s118, %s119
    %p123 = pneg %p117
    %p124 = scmp.eq.s32.totalorder %s10, 7
    %p125 = por %p123, %p124
    %p126 = scmp.ne.s32.totalorder %s118, %s121
    %p127 = scmp.eq.s32.totalorder %s10, 0
    %p128 = por %p126, %p127
    %p129 = scmp.ne.s32.totalorder %s118, %s121
    %p130 = scmp.eq.s32.totalorder %s15, 7
    %p131 = por %p129, %p130
    %p132 = scmp.ne.s32.totalorder %s121, %s122
    %p133 = scmp.eq.s32.totalorder %s15, 0
    %p134 = por %p132, %p133
    %p135 = scmp.ne.s32.totalorder %s121, %s122
    %p136 = scmp.eq.s32.totalorder %s16, 7
    %p137 = por %p135, %p136
    %p139 = scmp.ne.s32.totalorder %s122, %s138
    %p140 = scmp.eq.s32.totalorder %s16, 0
    %p141 = por %p139, %p140
    %s142 = ssub.s32 %s17, %s29
    %s143 = ssub.s32 %s18, %s25
    %s144 = sor.u32 %s142, %s143
    %p145 = scmp.eq.s32.totalorder %s144, 0
    %s147 = sadd.s32 %s146, 1
    %s148 = scalar_select %p145, %s146, %s147
    %p151 = pneg %p145
    %p152 = scmp.eq.s32.totalorder %s10, 7
    %p153 = por %p151, %p152
    %p154 = scmp.ne.s32.totalorder %s146, %s149
    %p155 = scmp.eq.s32.totalorder %s10, 0
    %p156 = por %p154, %p155
    %p157 = scmp.ne.s32.totalorder %s146, %s149
    %p158 = scmp.eq.s32.totalorder %s15, 7
    %p159 = por %p157, %p158
    %p160 = scmp.ne.s32.totalorder %s149, %s150
    %p161 = scmp.eq.s32.totalorder %s15, 0
    %p162 = por %p160, %p161
    %p163 = scmp.ne.s32.totalorder %s149, %s150
    %p164 = scmp.eq.s32.totalorder %s16, 7
    %p165 = por %p163, %p164
    %p167 = scmp.ne.s32.totalorder %s150, %s166
    %p168 = scmp.eq.s32.totalorder %s16, 0
    %p169 = por %p167, %p168
    %p170 = scmp.le.s32.totalorder 1, %s10
    %p171 = scmp.lt.s32.totalorder %s10, 9
    %p172 = pnand %p170, %p171
    %p173 = pneg %p172
    // Predicated region
    $region9: #{maxpool2d_nchw.1} parent=5 // pred_check
      _
    $region10: #{maxpool2d_nchw.1} parent=5 // pred_check_branch
      %175 = sbr.rel (%p172) target = $region12
    $region11: #{maxpool2d_nchw.1} parent=5 // pred_region
      %s176 = ssub.s32 %s10, 1
    $region12: #{maxpool2d_nchw.1} parent=5 // pred_fallthru
      _
    %p177 = scmp.lt.s32.totalorder %s10, 8
    // Predicated region
    $region13: #{maxpool2d_nchw.1} parent=5 // pred_check
      %p178 = pneg %p177
    $region14: #{maxpool2d_nchw.1} parent=5 // pred_check_branch
      %180 = sbr.rel (%p178) target = $region16
    $region15: #{maxpool2d_nchw.1} parent=5 // pred_region
      // Predicated region
      $region17: #{maxpool2d_nchw.1} parent=15 // pred_check
        %p181 = pneg %p44
      $region18: #{maxpool2d_nchw.1} parent=15 // pred_check_branch
        %183 = sbr.rel (%p181) target = $region20
      $region19: #{maxpool2d_nchw.1} parent=15 // pred_region
        %s184 = smul.u32 2, %s18
        %p185 = scmp.lt.s32.totalorder %s17, 1
        %s186 = scalar_select %p185, %s17, 1
        %p187 = scmp.lt.s32.totalorder %s184, 7
        %s188 = scalar_select %p187, %s184, 7
        %s189 = smul.addr %s188, 2
        %s190 = smul.addr %s186, 16
        %s191 = sadd.s32 %s189, %s190
        %s192 = smul.addr %s191, 8
        %s193 = scalar_lea.vmem %s0, %s192
        %s194 = smul.u32 2, %s18
      $region20: #{maxpool2d_nchw.1} parent=15 // pred_fallthru
        _
      // Predicated region
      $region21: #{maxpool2d_nchw.1} parent=15 // pred_check
        %p195 = pneg %p72
      $region22: #{maxpool2d_nchw.1} parent=15 // pred_check_branch
        %197 = sbr.rel (%p195) target = $region24
      $region23: #{maxpool2d_nchw.1} parent=15 // pred_region
        %s198 = smul.u32 2, %s18
        %p199 = scmp.lt.s32.totalorder %s17, 1
        %s200 = scalar_select %p199, %s17, 1
        %p201 = scmp.lt.s32.totalorder %s198, 7
        %s202 = scalar_select %p201, %s198, 7
        %s203 = smul.addr %s202, 2
        %s204 = smul.addr %s200, 16
        %s205 = sadd.s32 %s203, %s204
        %s206 = smul.addr %s205, 8
        %s207 = scalar_lea.vmem %s1, %s206
        %s208 = smul.u32 2, %s18
      $region24: #{maxpool2d_nchw.1} parent=15 // pred_fallthru
        _
      // Predicated region
      $region25: #{maxpool2d_nchw.1} parent=15 // pred_check
        %p209 = pneg %p100
      $region26: #{maxpool2d_nchw.1} parent=15 // pred_check_branch
        %211 = sbr.rel (%p209) target = $region28
      $region27: #{maxpool2d_nchw.1} parent=15 // pred_region
        %s212 = smul.u32 2, %s18
        %p213 = scmp.lt.s32.totalorder %s17, 1
        %s214 = scalar_select %p213, %s17, 1
        %p215 = scmp.lt.s32.totalorder %s212, 7
        %s216 = scalar_select %p215, %s212, 7
        %s217 = smul.addr %s214, 8
        %s218 = sadd.s32 %s216, %s217
        %s219 = smul.addr %s218, 8
        %s220 = scalar_lea.vmem %s2, %s219
        %s221 = smul.u32 2, %s18
      $region28: #{maxpool2d_nchw.1} parent=15 // pred_fallthru
        _
      // Predicated region
      $region29: #{maxpool2d_nchw.1} parent=15 // pred_check
        %p222 = pneg %p128
      $region30: #{maxpool2d_nchw.1} parent=15 // pred_check_branch
        %224 = sbr.rel (%p222) target = $region32
      $region31: #{maxpool2d_nchw.1} parent=15 // pred_region
        %s225 = smul.u32 2, %s18
        %p226 = scmp.lt.s32.totalorder %s17, 1
        %s227 = scalar_select %p226, %s17, 1
        %p228 = scmp.lt.s32.totalorder %s225, 7
        %s229 = scalar_select %p228, %s225, 7
        %s230 = smul.addr %s227, 8
        %s231 = sadd.s32 %s229, %s230
        %s232 = smul.addr %s231, 8
        %s233 = scalar_lea.vmem %s3, %s232
        %s234 = smul.u32 2, %s18
      $region32: #{maxpool2d_nchw.1} parent=15 // pred_fallthru
        _
    $region16: #{maxpool2d_nchw.1} parent=5 // pred_fallthru
      _
    %p235 = scmp.le.s32.totalorder 1, %s10
    %p236 = scmp.lt.s32.totalorder %s10, 9
    %p237 = pnand %p235, %p236
    %p238 = pneg %p237
    // Predicated region
    $region33: #{maxpool2d_nchw.1} parent=5 // pred_check
      _
    $region34: #{maxpool2d_nchw.1} parent=5 // pred_check_branch
      %240 = sbr.rel (%p237) target = $region36
    $region35: #{maxpool2d_nchw.1} parent=5 // pred_region
      %s241 = ssub.s32 %s10, 1
      %s242 = smul.u32 2, %s20
      %p243 = scmp.lt.s32.totalorder %s19, 1
      %s244 = scalar_select %p243, %s19, 1
      %p245 = scmp.lt.s32.totalorder %s242, 7
      %s246 = scalar_select %p245, %s242, 7
      %s247 = smul.addr %s246, 2
      %s248 = smul.addr %s244, 16
      %s249 = sadd.s32 %s247, %s248
      %s250 = smul.addr %s249, 8
      %s251 = scalar_lea.vmem %s0, %s250
      %p252 = pneg %p50
      %p253 = pneg %p47
      %s254 = smul.u32 2, %s20
      %p255 = scmp.lt.s32.totalorder %s19, 1
      %s256 = scalar_select %p255, %s19, 1
      %p257 = scmp.lt.s32.totalorder %s254, 7
      %s258 = scalar_select %p257, %s254, 7
      %s259 = smul.addr %s258, 2
      %s260 = smul.addr %s256, 16
      %s261 = sadd.s32 %s259, %s260
      %s262 = smul.addr %s261, 8
      %s263 = scalar_lea.vmem %s1, %s262
      %p264 = pneg %p78
      %p265 = pneg %p75
      %s266 = smul.u32 2, %s20
      %p267 = scmp.lt.s32.totalorder %s19, 1
      %s268 = scalar_select %p267, %s19, 1
      %p269 = scmp.lt.s32.totalorder %s266, 7
      %s270 = scalar_select %p269, %s266, 7
      %s271 = smul.addr %s268, 8
      %s272 = sadd.s32 %s270, %s271
      %s273 = smul.addr %s272, 8
      %s274 = scalar_lea.vmem %s2, %s273
      %p275 = pneg %p106
      %p276 = pneg %p103
      %s277 = smul.u32 2, %s20
      %p278 = scmp.lt.s32.totalorder %s19, 1
      %s279 = scalar_select %p278, %s19, 1
      %p280 = scmp.lt.s32.totalorder %s277, 7
      %s281 = scalar_select %p280, %s277, 7
      %s282 = smul.addr %s279, 8
      %s283 = sadd.s32 %s281, %s282
      %s284 = smul.addr %s283, 8
      %s285 = scalar_lea.vmem %s3, %s284
      %p286 = pneg %p134
      %p287 = pneg %p131
      %p288 = pneg %p162
      %p289 = pneg %p159
      %s290 = smul.u32 2, %s20
      %p291 = scmp.lt.s32.totalorder %s19, 1
      %s292 = scalar_select %p291, %s19, 1
      %p293 = scmp.lt.s32.totalorder %s290, 7
      %s294 = scalar_select %p293, %s290, 7
      %s295 = smul.addr %s292, 8
      %s296 = sadd.s32 %s294, %s295
      %s297 = smul.addr %s296, 8
      %s298 = scalar_lea.vmem %s4, %s297
      %s299 = smul.u32 2, %s20
      %p300 = scmp.lt.s32.totalorder %s19, 1
      %s301 = scalar_select %p300, %s19, 1
      %p302 = scmp.lt.s32.totalorder %s299, 7
      %s303 = scalar_select %p302, %s299, 7
      %s304 = smul.addr %s303, 2
      %s305 = smul.addr %s301, 16
      %s306 = sadd.s32 %s304, %s305
      %s307 = smul.addr %s306, 8
      %s308 = scalar_lea.vmem %s0, %s307
      %s309 = smul.u32 2, %s20
      %s310 = smul.u32 2, %s20
      %p311 = scmp.lt.s32.totalorder %s19, 1
      %s312 = scalar_select %p311, %s19, 1
      %p313 = scmp.lt.s32.totalorder %s310, 7
      %s314 = scalar_select %p313, %s310, 7
      %s315 = smul.addr %s314, 2
      %s316 = smul.addr %s312, 16
      %s317 = sadd.s32 %s315, %s316
      %s318 = smul.addr %s317, 8
      %s319 = scalar_lea.vmem %s1, %s318
      %s320 = smul.u32 2, %s20
      %s321 = smul.u32 2, %s20
      %p322 = scmp.lt.s32.totalorder %s19, 1
      %s323 = scalar_select %p322, %s19, 1
      %p324 = scmp.lt.s32.totalorder %s321, 7
      %s325 = scalar_select %p324, %s321, 7
      %s326 = smul.addr %s323, 8
      %s327 = sadd.s32 %s325, %s326
      %s328 = smul.addr %s327, 8
      %s329 = scalar_lea.vmem %s2, %s328
      %s330 = smul.u32 2, %s20
      %s331 = smul.u32 2, %s20
      %p332 = scmp.lt.s32.totalorder %s19, 1
      %s333 = scalar_select %p332, %s19, 1
      %p334 = scmp.lt.s32.totalorder %s331, 7
      %s335 = scalar_select %p334, %s331, 7
      %s336 = smul.addr %s333, 8
      %s337 = sadd.s32 %s335, %s336
      %s338 = smul.addr %s337, 8
      %s339 = scalar_lea.vmem %s3, %s338
      %s340 = smul.u32 2, %s20
      %s341 = smul.u32 2, %s20
      %p342 = scmp.lt.s32.totalorder %s19, 1
      %s343 = scalar_select %p342, %s19, 1
      %p344 = scmp.lt.s32.totalorder %s341, 7
      %s345 = scalar_select %p344, %s341, 7
      %s346 = smul.addr %s343, 8
      %s347 = sadd.s32 %s345, %s346
      %s348 = smul.addr %s347, 8
      %s349 = scalar_lea.vmem %s4, %s348
      %s350 = smul.u32 2, %s20
      %v351 = vld [vmem:[%s308] sm:$0xff]
      %v352 = vld [vmem:[%s308 + $0x8] sm:$0x1]
      %v353 = vld [vmem:[%s308 + $0x10] sm:$0xff]
      %v354 = vld [vmem:[%s308 + $0x18] sm:$0x1]
      %v355 = vld [vmem:[%s319] sm:$0xff]
      %v356 = vld [vmem:[%s319 + $0x8] sm:$0x1]
      %v357 = vld [vmem:[%s319 + $0x10] sm:$0xff]
      %v358 = vld [vmem:[%s319 + $0x18] sm:$0x1]
      %v359 = vld [vmem:[%s329] sm:$0xff]
      %v360 = vld [vmem:[%s329 + $0x8] sm:$0xff]
      %v361 = vld [vmem:[%s339] sm:$0xff]
      %v362 = vld [vmem:[%s339 + $0x8] sm:$0xff]
      %v363 = vmax.f32 %v351, %v355
      %v364 = vmax.f32 %v352, %v356
      %v365 = vmax.f32 %v353, %v357
      %v366 = vmax.f32 %v354, %v358
      %371 = vrot.lane.b32.xlu0 %v351, 127
      %v372 = vpop.permute.xlu0 %371
      %373 = vrot.lane.b32.xlu0 %v352, 127
      %v374 = vpop.permute.xlu0 %373
      %375 = vrot.lane.b32.xlu0 %v353, 127
      %v376 = vpop.permute.xlu0 %375
      %377 = vrot.lane.b32.xlu0 %v354, 127
      %v378 = vpop.permute.xlu0 %377
      %v383 = vmax.f32 %v363, %v372
      %v384 = vmax.f32 %v364, %v374
      %v385 = vmax.f32 %v365, %v376
      %v386 = vmax.f32 %v366, %v378
      %v387 = vmax.f32 %v359, %v361
      %v388 = vmax.f32 %v360, %v362
      %391 = vrot.lane.b32.xlu0 %v359, 127
      %v392 = vpop.permute.xlu0 %391
      %393 = vrot.lane.b32.xlu0 %v360, 127
      %v394 = vpop.permute.xlu0 %393
      %v397 = vmax.f32 %v387, %v392
      %v398 = vmax.f32 %v388, %v394
      %v399 = vmax.f32 %v383, %v397
      %v400 = vmax.f32 %v385, %v398
      %vm405 = vcmask 1046528
      %v406 = vrot.slane %v383, 1
      %v407 = vrot.slane %v384, 1
      %v408 = vsel %vm405, %v406, %v407
      %v409 = vrot.slane %v385, 1
      %v410 = vrot.slane %v386, 1
      %v411 = vsel %vm405, %v409, %v410
      %v414 = vmax.f32 %v399, %v408
      %v415 = vmax.f32 %v400, %v411
      %vm416 = vcmask 56320
      %417 = vst.msk [vmem:[%s349] sm:$0xff] %vm416, %v414
      %418 = vst.msk [vmem:[%s349 + $0x8] sm:$0xff] %vm416, %v415
      %s419 = smul.u32 2, %s20
      %p420 = scmp.lt.s32.totalorder %s19, 1
      %s421 = scalar_select %p420, %s19, 1
      %p422 = scmp.lt.s32.totalorder %s419, 7
      %s423 = scalar_select %p422, %s419, 7
      %s424 = smul.addr %s421, 8
      %s425 = sadd.s32 %s423, %s424
      %s426 = smul.addr %s425, 8
      %s427 = scalar_lea.vmem %s4, %s426
      // Predicated region
      $region37: #{maxpool2d_nchw.1} parent=35 // pred_check
        %p428 = pneg %p159
      $region38: #{maxpool2d_nchw.1} parent=35 // pred_check_branch
        %430 = sbr.rel (%p428) target = $region40
      $region39: #{maxpool2d_nchw.1} parent=35 // pred_region
        %s431 = smul.u32 2, %s20
      $region40: #{maxpool2d_nchw.1} parent=35 // pred_fallthru
        _
    $region36: #{maxpool2d_nchw.1} parent=5 // pred_fallthru
      _
    %p432 = scmp.le.s32.totalorder 2, %s10
    // Predicated region
    $region41: #{maxpool2d_nchw.1} parent=5 // pred_check
      %p433 = pneg %p432
    $region42: #{maxpool2d_nchw.1} parent=5 // pred_check_branch
      %435 = sbr.rel (%p433) target = $region44
    $region43: #{maxpool2d_nchw.1} parent=5 // pred_region
      %s436 = ssub.s32 %s10, 2
      // Predicated region
      $region45: #{maxpool2d_nchw.1} parent=43 // pred_check
        %p437 = pneg %p165
      $region46: #{maxpool2d_nchw.1} parent=43 // pred_check_branch
        %439 = sbr.rel (%p437) target = $region48
      $region47: #{maxpool2d_nchw.1} parent=43 // pred_region
        %s440 = smul.u32 2, %s22
        %p441 = scmp.lt.s32.totalorder %s21, 1
        %s442 = scalar_select %p441, %s21, 1
        %p443 = scmp.lt.s32.totalorder %s440, 7
        %s444 = scalar_select %p443, %s440, 7
        %s445 = smul.addr %s442, 8
        %s446 = sadd.s32 %s444, %s445
        %s447 = smul.addr %s446, 8
        %s448 = scalar_lea.vmem %s4, %s447
      $region48: #{maxpool2d_nchw.1} parent=43 // pred_fallthru
        _
    $region44: #{maxpool2d_nchw.1} parent=5 // pred_fallthru
      _
  $region6: #{maxpool2d_nchw.1} parent=0 // loop_footer
    %s14 = sadd.s32 1, %s10
  $region7: #{maxpool2d_nchw.1} parent=0 // loop_footer_branch
    %9 = sbr.rel target = $region3
  $region8: #{maxpool2d_nchw.1} parent=0 // loop_exit
    _

</llo_original>
